<compile_context>
chip_gen: v5e
topology: v5e:2x2
jax: 0.10.0
libtpu: 0.0.40
codegen_flags: <defaults>
</compile_context>

<pallas_src>
import jax
import jax.numpy as jnp
import numpy as np
from jax.experimental import pallas as pl
from jax.experimental.pallas import tpu as pltpu


def _pred_head_kernel(x_ref, w_ref, b_ref, o_ref):
    # x_ref: (1, C_in, TL)   w_ref: (H, C_in)   b_ref: (H, 1)   o_ref: (1, H, TL)
    y = jnp.dot(w_ref[...], x_ref[0], preferred_element_type=jnp.float32)  # (H, TL) f32
    o_ref[0] = (y + b_ref[...]).astype(o_ref.dtype)


def _choose_tile_l(L, c_in, h, dtype_bytes, vmem_budget=12 << 20, max_tile=32768):
    """Pick the L tile.

    Per-lane VMEM bytes:
      2 * c_in * dtype_bytes   double-buffered x tile
      2 * h    * dtype_bytes   double-buffered out tile
      h * 4                    f32 dot + bias-add intermediate (single buffer)
    Budget (12 MiB default) stays under every generation's scoped VMEM default
    (v5e 16 MiB, v6e/v7x 32 MiB) without setting vmem_limit_bytes.
    """
    per_lane = 2 * c_in * dtype_bytes + 2 * h * dtype_bytes + h * 4
    tl = (vmem_budget // per_lane) // 128 * 128
    tl = max(128, min(tl, max_tile))
    if tl >= L:
        # Single tile covering the whole (possibly unaligned) L dim: block dim
        # equal to the full array dim is always legal.
        return L
    return tl  # multiple of 128; last grid tile may be partial (masked by Pallas)


def pred_head(x, weight, bias, *, max_tile_l=32768, vmem_budget=12 << 20):
    """x: (B, C_in, L), weight: (H, C_in), bias: (H,) -> (B, H, L)."""
    B, C_in, L = x.shape
    H = weight.shape[0]

    dtype_bytes = max(jnp.dtype(x.dtype).itemsize, 1)
    TL = _choose_tile_l(L, C_in, H, max(dtype_bytes, 4),
                        vmem_budget=vmem_budget, max_tile=max_tile_l)
    n_l = pl.cdiv(L, TL)

    bias2d = bias.reshape(H, 1).astype(jnp.float32)

    flops = 2 * B * H * C_in * L
    bytes_accessed = (dtype_bytes * (B * C_in * L + B * H * L)
                      + 4 * (H * C_in + H))

    out = pl.pallas_call(
        _pred_head_kernel,
        out_shape=jax.ShapeDtypeStruct((B, H, L), x.dtype),
        grid_spec=pl.GridSpec(
            grid=(B, n_l),
            in_specs=[
                pl.BlockSpec((1, C_in, TL), lambda b, l: (b, 0, l)),
                pl.BlockSpec((H, C_in), lambda b, l: (0, 0)),   # resident weight
                pl.BlockSpec((H, 1), lambda b, l: (0, 0)),      # resident bias
            ],
            out_specs=pl.BlockSpec((1, H, TL), lambda b, l: (b, 0, l)),
        ),
        compiler_params=pltpu.CompilerParams(
            dimension_semantics=("parallel", "parallel")),
        cost_estimate=pl.CostEstimate(
            flops=flops, transcendentals=0, bytes_accessed=bytes_accessed),
    )(x, weight, bias2d)

    return out


if __name__ == "__main__":
    # Small shapes consistent with the module's forward: (batch, in_chn, seq).
    B, in_chn, hid_chn = 2, 16, 32

    key = jax.random.PRNGKey(0)
    kx, kw, kb, kx2 = jax.random.split(key, 4)

    # Deterministic Linear-like init (uniform in +/- 1/sqrt(in_chn)), synthetic.
    bound = 1.0 / np.sqrt(in_chn)
    weight = jax.random.uniform(kw, (hid_chn, in_chn), jnp.float32, -bound, bound)
    bias = jax.random.uniform(kb, (hid_chn,), jnp.float32, -bound, bound)

    # Case 1: L a multiple of 128 (fully lane-dense path).
    L1 = 128
    x1 = jax.random.normal(kx, (B, in_chn, L1), dtype=jnp.float32)
    out1 = jax.block_until_ready(pred_head(x1, weight, bias))
    ref1 = jnp.einsum("bcl,hc->bhl", x1, weight) + bias[None, :, None]
    np.testing.assert_allclose(np.asarray(out1), np.asarray(ref1),
                               rtol=1e-5, atol=1e-5)
    assert out1.shape == (B, hid_chn, L1)

    # Case 2: L not a multiple of 128 (exercises the masked boundary tile; no
    # wrapper-side padding or slicing).
    L2 = 200
    x2 = jax.random.normal(kx2, (B, in_chn, L2), dtype=jnp.float32)
    out2 = jax.block_until_ready(pred_head(x2, weight, bias))
    ref2 = jnp.einsum("bcl,hc->bhl", x2, weight) + bias[None, :, None]
    np.testing.assert_allclose(np.asarray(out2), np.asarray(ref2),
                               rtol=1e-5, atol=1e-5)
    assert out2.shape == (B, hid_chn, L2)

    # Case 3: L large enough to force multiple L tiles with a partial last tile
    # (multi-step pipeline path), using a small forced tile.
    L3 = 3 * 128 + 72
    x3 = jax.random.normal(jax.random.PRNGKey(3), (B, in_chn, L3), dtype=jnp.float32)
    out3 = jax.block_until_ready(pred_head(x3, weight, bias, max_tile_l=128))
    ref3 = jnp.einsum("bcl,hc->bhl", x3, weight) + bias[None, :, None]
    np.testing.assert_allclose(np.asarray(out3), np.asarray(ref3),
                               rtol=1e-5, atol=1e-5)
    assert out3.shape == (B, hid_chn, L3)

    print("KERNEL_OK")
</pallas_src>

<mosaic_0001>
module attributes {stable_mosaic.version = 11 : i64} {
  func.func @_pred_head_kernel(%arg0: i32, %arg1: i32, %arg2: memref<1x16x128xf32, #tpu.memory_space<vmem>>, %arg3: memref<32x16xf32, #tpu.memory_space<vmem>>, %arg4: memref<32x1xf32, #tpu.memory_space<vmem>>, %arg5: memref<1x32x128xf32, #tpu.memory_space<vmem>>) attributes {dimension_semantics = [#tpu.dimension_semantics<parallel>, #tpu.dimension_semantics<parallel>], iteration_bounds = array<i64: 2, 1>, scalar_prefetch = 0 : i64, scratch_operands = 0 : i64, tpu.core_type = #tpu.core_type<tc>, window_params = [{transform_indices = @transform_0, window_bounds = array<i64: 1, 16, 128>}, {pipeline_mode = #tpu.pipeline_mode<synchronous>, transform_indices = @transform_1, window_bounds = array<i64: 32, 16>}, {pipeline_mode = #tpu.pipeline_mode<synchronous>, transform_indices = @transform_2, window_bounds = array<i64: 32, 1>}, {transform_indices = @transform_3, window_bounds = array<i64: 1, 32, 128>}]} {
    %c0 = arith.constant 0 : index
    %c0_0 = arith.constant 0 : index
    %0 = vector.load %arg3[%c0, %c0_0] : memref<32x16xf32, #tpu.memory_space<vmem>>, vector<32x16xf32>
    %c0_1 = arith.constant 0 : index
    %c0_2 = arith.constant 0 : index
    %c0_3 = arith.constant 0 : index
    %1 = vector.load %arg2[%c0_1, %c0_2, %c0_3] : memref<1x16x128xf32, #tpu.memory_space<vmem>>, vector<1x16x128xf32>
    %2 = vector.shape_cast %1 : vector<1x16x128xf32> to vector<16x128xf32>
    %cst = arith.constant dense<0.000000e+00> : vector<32x128xf32>
    %3 = tpu.matmul %0, %2, %cst {dimension_numbers = #tpu.dot_dimension_numbers<[1], [0], [0], [1], [0, 0, 1, 1], [], []>} : vector<32x16xf32>, vector<16x128xf32>, vector<32x128xf32> -> vector<32x128xf32>
    %c0_4 = arith.constant 0 : index
    %c0_5 = arith.constant 0 : index
    %4 = vector.load %arg4[%c0_4, %c0_5] : memref<32x1xf32, #tpu.memory_space<vmem>>, vector<32x1xf32>
    %5 = vector.broadcast %4 : vector<32x1xf32> to vector<32x128xf32>
    %6 = arith.addf %3, %5 : vector<32x128xf32>
    %c0_6 = arith.constant 0 : index
    %c0_7 = arith.constant 0 : index
    %c0_8 = arith.constant 0 : index
    %7 = vector.load %arg5[%c0_6, %c0_7, %c0_8] : memref<1x32x128xf32, #tpu.memory_space<vmem>>, vector<1x32x128xf32>
    %8 = vector.shape_cast %7 : vector<1x32x128xf32> to vector<32x128xf32>
    %9 = vector.shape_cast %6 : vector<32x128xf32> to vector<1x32x128xf32>
    tpu.vector_store %arg5[%c0_6, %c0_7, %c0_8], %9 {strides = array<i32>} : memref<1x32x128xf32, #tpu.memory_space<vmem>>, vector<1x32x128xf32>,
    return
  }
  func.func @transform_0(%arg0: i32, %arg1: i32) -> (i32, i32, i32) {
    %c0_i32 = arith.constant 0 : i32
    %c0_i32_0 = arith.constant 0 : i32
    return %arg0, %c0_i32, %arg1 : i32, i32, i32
  }
  func.func @transform_1(%arg0: i32, %arg1: i32) -> (i32, i32) {
    %c0_i32 = arith.constant 0 : i32
    %c0_i32_0 = arith.constant 0 : i32
    %c0_i32_1 = arith.constant 0 : i32
    return %c0_i32, %c0_i32_0 : i32, i32
  }
  func.func @transform_2(%arg0: i32, %arg1: i32) -> (i32, i32) {
    %c0_i32 = arith.constant 0 : i32
    %c0_i32_0 = arith.constant 0 : i32
    %c0_i32_1 = arith.constant 0 : i32
    return %c0_i32, %c0_i32_0 : i32, i32
  }
  func.func @transform_3(%arg0: i32, %arg1: i32) -> (i32, i32, i32) {
    %c0_i32 = arith.constant 0 : i32
    %c0_i32_0 = arith.constant 0 : i32
    return %arg0, %c0_i32, %arg1 : i32, i32, i32
  }
}

</mosaic_0001>

<llo_original>
// kernel: tpu_custom_call.1
$region0: #{tpu_custom_call.1}
  #allocation0 [shape = 'u32[]', space=smem, size = 0x4, offset = 0x4, fixed_abs, tag = 'smem constant byte address 0x4 - core index']
  #allocation1 [shape = 'u32[72,128]{1,0:T(1,128)}', space=vmem, size = 0x9000, scoped, tag = 'internal scratch']
  %s0 = inlined_call_operand.vmem [shape: f32[2,16,128], index: 0, kind: input, shape index: {}]
  %s1 = inlined_call_operand.vmem [shape: f32[32,16], index: 1, kind: input, shape index: {}]
  %s2 = inlined_call_operand.vmem [shape: f32[32,1], index: 2, kind: input, shape index: {}]
  %s3 = inlined_call_operand.hbm [shape: f32[2,32,128], index: 3, kind: output, shape index: {}]
  %s4 = sld [smem:[#allocation0]]
  $region45: #{tpu_custom_call.1} parent=0
    _
  %s6 = ssub.s32 1, %s4
  %s7 = scalar_select 0, %s6, %s4
  $region1: #{tpu_custom_call.1} parent=0
    #allocation2 [shape = 'u8[32768]{0}', space=vmem, size = 0x8000, scoped, tag = 'output window, operand 0']
    #allocation3 [shape = 's32[2]{0}', space=sflag, size = 0x8, scoped, tag = 'scoped memory for tpu_custom_call.1']
    %8 = vsyncpa [#allocation3], 0
    %s9 = scalar_lea.sflag [#allocation3], 1
    %10 = vsyncpa %s9, 0
    loop: start=0, step=1, limit=4
    $region2: #{tpu_custom_call.1} parent=1 // loop_pre_header
      _
    $region3: #{tpu_custom_call.1} parent=1 // loop_header
      %s12 = sphi 0, %s16
      %p13 = scmp.ge.s32.totalorder %s12, 4
      %s19 = sphi 0, %s31
      %s20 = sphi 0, %s27
      %s21 = sphi 0, %s19
      %s22 = sphi 0, %s20
      %s23 = sphi 0, %s21
      %s24 = sphi 0, %s22
      %s36 = sphi 0, %s38
      %s39 = sphi 0, %s36
      %s40 = sphi 0, %s39
      %s56 = sphi 0, %s40
      %s60 = sphi 0, %s60
      %s62 = sphi 0, %s60
      %s63 = sphi 0, %s62
      %s77 = sphi 0, %s63
      %s81 = sphi 0, %s81
      %s83 = sphi 0, %s81
      %s84 = sphi 0, %s83
      %s98 = sphi 0, %s84
      %s106 = sphi 0, %s108
      %s109 = sphi 0, %s106
      %s110 = sphi 0, %s109
      %s126 = sphi 0, %s110
    $region4: #{tpu_custom_call.1} parent=1 // loop_header_branch
      %15 = sbr.rel (%p13) target = $region8
    $region5: #{tpu_custom_call.1} parent=1 // loop_body
      %s17 = ssub.s32 %s12, 1
      %s18 = ssub.s32 %s12, 2
      %s25 = sadd.s32 1, %s20
      %p26 = scmp.ge.s32.totalorder %s25, 1
      %s27 = scalar_select %p26, 0, %s25
      %s28 = sadd.s32 1, %s19
      %s29 = scalar_select %p26, %s28, %s19
      %p30 = scmp.ge.s32.totalorder %s29, 2
      %s31 = scalar_select %p30, 0, %s29
      %s32 = ssub.s32 %s19, %s31
      %s33 = ssub.s32 %s20, %s27
      %s34 = sor.u32 %s32, %s33
      %p35 = scmp.eq.s32.totalorder %s34, 0
      %s37 = sadd.s32 %s36, 1
      %s38 = scalar_select %p35, %s36, %s37
      %p41 = pneg %p35
      %p42 = scmp.eq.s32.totalorder %s12, 1
      %p43 = por %p41, %p42
      %p44 = scmp.ne.s32.totalorder %s36, %s39
      %p45 = scmp.eq.s32.totalorder %s12, 0
      %p46 = por %p44, %p45
      %p47 = scmp.ne.s32.totalorder %s36, %s39
      %p48 = scmp.eq.s32.totalorder %s17, 1
      %p49 = por %p47, %p48
      %p50 = scmp.ne.s32.totalorder %s39, %s40
      %p51 = scmp.eq.s32.totalorder %s17, 0
      %p52 = por %p50, %p51
      %p53 = scmp.ne.s32.totalorder %s39, %s40
      %p54 = scmp.eq.s32.totalorder %s18, 1
      %p55 = por %p53, %p54
      %p57 = scmp.ne.s32.totalorder %s40, %s56
      %p58 = scmp.eq.s32.totalorder %s18, 0
      %p59 = por %p57, %p58
      %s61 = sadd.s32 %s60, 1
      %p64 = scmp.eq.s32.totalorder %s12, 1
      %p65 = scmp.ne.s32.totalorder %s60, %s62
      %p66 = scmp.eq.s32.totalorder %s12, 0
      %p67 = por %p65, %p66
      %p68 = scmp.ne.s32.totalorder %s60, %s62
      %p69 = scmp.eq.s32.totalorder %s17, 1
      %p70 = por %p68, %p69
      %p71 = scmp.ne.s32.totalorder %s62, %s63
      %p72 = scmp.eq.s32.totalorder %s17, 0
      %p73 = por %p71, %p72
      %p74 = scmp.ne.s32.totalorder %s62, %s63
      %p75 = scmp.eq.s32.totalorder %s18, 1
      %p76 = por %p74, %p75
      %p78 = scmp.ne.s32.totalorder %s63, %s77
      %p79 = scmp.eq.s32.totalorder %s18, 0
      %p80 = por %p78, %p79
      %s82 = sadd.s32 %s81, 1
      %p85 = scmp.eq.s32.totalorder %s12, 1
      %p86 = scmp.ne.s32.totalorder %s81, %s83
      %p87 = scmp.eq.s32.totalorder %s12, 0
      %p88 = por %p86, %p87
      %p89 = scmp.ne.s32.totalorder %s81, %s83
      %p90 = scmp.eq.s32.totalorder %s17, 1
      %p91 = por %p89, %p90
      %p92 = scmp.ne.s32.totalorder %s83, %s84
      %p93 = scmp.eq.s32.totalorder %s17, 0
      %p94 = por %p92, %p93
      %p95 = scmp.ne.s32.totalorder %s83, %s84
      %p96 = scmp.eq.s32.totalorder %s18, 1
      %p97 = por %p95, %p96
      %p99 = scmp.ne.s32.totalorder %s84, %s98
      %p100 = scmp.eq.s32.totalorder %s18, 0
      %p101 = por %p99, %p100
      %s102 = ssub.s32 %s19, %s31
      %s103 = ssub.s32 %s20, %s27
      %s104 = sor.u32 %s102, %s103
      %p105 = scmp.eq.s32.totalorder %s104, 0
      %s107 = sadd.s32 %s106, 1
      %s108 = scalar_select %p105, %s106, %s107
      %p111 = pneg %p105
      %p112 = scmp.eq.s32.totalorder %s12, 1
      %p113 = por %p111, %p112
      %p114 = scmp.ne.s32.totalorder %s106, %s109
      %p115 = scmp.eq.s32.totalorder %s12, 0
      %p116 = por %p114, %p115
      %p117 = scmp.ne.s32.totalorder %s106, %s109
      %p118 = scmp.eq.s32.totalorder %s17, 1
      %p119 = por %p117, %p118
      %p120 = scmp.ne.s32.totalorder %s109, %s110
      %p121 = scmp.eq.s32.totalorder %s17, 0
      %p122 = por %p120, %p121
      %p123 = scmp.ne.s32.totalorder %s109, %s110
      %p124 = scmp.eq.s32.totalorder %s18, 1
      %p125 = por %p123, %p124
      %p127 = scmp.ne.s32.totalorder %s110, %s126
      %p128 = scmp.eq.s32.totalorder %s18, 0
      %p129 = por %p127, %p128
      %p130 = scmp.le.s32.totalorder 1, %s12
      %p131 = scmp.lt.s32.totalorder %s12, 3
      %p132 = pnand %p130, %p131
      %p133 = pneg %p132
      // Predicated region
      $region9: #{tpu_custom_call.1} parent=5 // pred_check
        _
      $region10: #{tpu_custom_call.1} parent=5 // pred_check_branch
        %135 = sbr.rel (%p132) target = $region12
      $region11: #{tpu_custom_call.1} parent=5 // pred_region
        %s136 = ssub.s32 %s12, 1
        // Predicated region
        $region13: #{tpu_custom_call.1} parent=11 // pred_check
          %p137 = pneg %p73
        $region14: #{tpu_custom_call.1} parent=11 // pred_check_branch
          %139 = sbr.rel (%p137) target = $region16
        $region15: #{tpu_custom_call.1} parent=11 // pred_region
          _
        $region16: #{tpu_custom_call.1} parent=11 // pred_fallthru
          _
        // Predicated region
        $region17: #{tpu_custom_call.1} parent=11 // pred_check
          %p140 = pneg %p94
        $region18: #{tpu_custom_call.1} parent=11 // pred_check_branch
          %142 = sbr.rel (%p140) target = $region20
        $region19: #{tpu_custom_call.1} parent=11 // pred_region
          _
        $region20: #{tpu_custom_call.1} parent=11 // pred_fallthru
          _
      $region12: #{tpu_custom_call.1} parent=5 // pred_fallthru
        _
      %p143 = scmp.lt.s32.totalorder %s12, 2
      // Predicated region
      $region21: #{tpu_custom_call.1} parent=5 // pred_check
        %p144 = pneg %p143
      $region22: #{tpu_custom_call.1} parent=5 // pred_check_branch
        %146 = sbr.rel (%p144) target = $region24
      $region23: #{tpu_custom_call.1} parent=5 // pred_region
        // Predicated region
        $region25: #{tpu_custom_call.1} parent=23 // pred_check
          %p147 = pneg %p46
        $region26: #{tpu_custom_call.1} parent=23 // pred_check_branch
          %149 = sbr.rel (%p147) target = $region28
        $region27: #{tpu_custom_call.1} parent=23 // pred_region
          %p150 = scmp.lt.s32.totalorder %s19, 1
          %s151 = scalar_select %p150, %s19, 1
          %p152 = scmp.lt.s32.totalorder %s20, 0
          %s153 = scalar_select %p152, %s20, 0
          %s154 = smul.addr %s151, 2
          %s155 = sadd.s32 %s153, %s154
          %s156 = smul.addr %s155, 8
          %s157 = scalar_lea.vmem %s0, %s156
        $region28: #{tpu_custom_call.1} parent=23 // pred_fallthru
          _
      $region24: #{tpu_custom_call.1} parent=5 // pred_fallthru
        _
      %p158 = scmp.le.s32.totalorder 1, %s12
      %p159 = scmp.lt.s32.totalorder %s12, 3
      %p160 = pnand %p158, %p159
      %p161 = pneg %p160
      // Predicated region
      $region29: #{tpu_custom_call.1} parent=5 // pred_check
        _
      $region30: #{tpu_custom_call.1} parent=5 // pred_check_branch
        %163 = sbr.rel (%p160) target = $region32
      $region31: #{tpu_custom_call.1} parent=5 // pred_region
        %s164 = ssub.s32 %s12, 1
        %p165 = scmp.lt.s32.totalorder %s21, 1
        %s166 = scalar_select %p165, %s21, 1
        %p167 = scmp.lt.s32.totalorder %s22, 0
        %s168 = scalar_select %p167, %s22, 0
        %s169 = smul.addr %s166, 2
        %s170 = sadd.s32 %s168, %s169
        %s171 = smul.addr %s170, 8
        %s172 = scalar_lea.vmem %s0, %s171
        %p173 = pneg %p52
        %p174 = pneg %p49
        %p175 = pneg %p73
        %p176 = pneg %p70
        %p177 = pneg %p94
        %p178 = pneg %p91
        %p179 = pneg %p122
        %p180 = pneg %p119
        %s181 = sand.u32 %s109, 1
        %s182 = scalar_lea.sflag [#allocation3], %s181
        %s183 = sand.u32 %s109, 1
        %s184 = smul.addr %s183, 32
        %s185 = scalar_lea.vmem [#allocation2], %s184
        %p186 = scmp.lt.s32.totalorder %s21, 1
        %s187 = scalar_select %p186, %s21, 1
        %p188 = scmp.lt.s32.totalorder %s22, 0
        %s189 = scalar_select %p188, %s22, 0
        %s190 = smul.addr %s187, 2
        %s191 = sadd.s32 %s189, %s190
        %s192 = smul.addr %s191, 8
        %s193 = scalar_lea.vmem %s0, %s192
        %v194 = vld [vmem:[%s1] sm:$0xff]
        %v195 = vld [vmem:[%s1 + $0x8] sm:$0xff]
        %v196 = vld [vmem:[%s1 + $0x10] sm:$0xff]
        %v197 = vld [vmem:[%s1 + $0x18] sm:$0xff]
        %v198 = vld [vmem:[%s193] sm:$0xff]
        %v199 = vld [vmem:[%s193 + $0x8] sm:$0xff]
        %v200 = vld [vmem:[%s2] sm:$0xff]
        %v201 = vld [vmem:[%s2 + $0x8] sm:$0xff]
        %v202 = vld [vmem:[%s2 + $0x10] sm:$0xff]
        %v203 = vld [vmem:[%s2 + $0x18] sm:$0xff]
        %205 = vset.pattern.permute.xlu0 0
        %206 = vperm.xlu0 %205, %v200
        %v207 = vpop.permute.xlu0 %206
        %210 = vset.pattern.permute.xlu0 0
        %211 = vperm.xlu0 %210, %v201
        %v212 = vpop.permute.xlu0 %211
        %215 = vset.pattern.permute.xlu0 0
        %216 = vperm.xlu0 %215, %v202
        %v217 = vpop.permute.xlu0 %216
        %220 = vset.pattern.permute.xlu0 0
        %221 = vperm.xlu0 %220, %v203
        %v222 = vpop.permute.xlu0 %221
        %vm224 = vcmask 130048
        %v226 = vsel %vm224, %v194, 0
        %v229 = vsel %vm224, %v195, 0
        %v232 = vsel %vm224, %v196, 0
        %v235 = vsel %vm224, %v197, 0
        %237 = vmatpush.msra.mxu0 0.0
        %238 = vmatpush.msra.mxu0 0.0
        %239 = vmatpush.msra.mxu0 0.0
        %240 = vmatpush.msra.mxu0 0.0
        %241 = vmatpush.msra.mxu0 0.0
        %242 = vmatpush.msra.mxu0 0.0
        %243 = vmatpush.msra.mxu0 0.0
        %244 = vmatpush.msra.mxu0 0.0
        %245 = vmatpush.msra.mxu0 0.0
        %246 = vmatpush.msra.mxu0 0.0
        %247 = vmatpush.msra.mxu0 0.0
        %248 = vmatpush.msra.mxu0 0.0
        %249 = vmatpush.msra.mxu0 0.0
        %250 = vmatpush.msra.mxu0 0.0
        %251 = vmatpush.msra.mxu0 %v199
        %252 = vmatpush.msra.mxu0 %v198
        %253 = vmatmul.f32.gmra.mxu0 %v226
        %v254 = vpop.f32.mrf.mxu0
        %v255 = vadd.f32 %v207, %v254
        %256 = vmatmul.f32.gmra.mxu0 %v229
        %v257 = vpop.f32.mrf.mxu0
        %v258 = vadd.f32 %v212, %v257
        %259 = vmatmul.f32.gmra.mxu0 %v232
        %v260 = vpop.f32.mrf.mxu0
        %v261 = vadd.f32 %v217, %v260
        %262 = vmatmul.f32.gmra.mxu0 %v235
        %v263 = vpop.f32.mrf.mxu0
        %v264 = vadd.f32 %v222, %v263
        %265 = vdwg.mxu0
        %266 = vst [vmem:[%s185] sm:$0xff] %v255
        %267 = vst [vmem:[%s185 + $0x8] sm:$0xff] %v258
        %268 = vst [vmem:[%s185 + $0x10] sm:$0xff] %v261
        %269 = vst [vmem:[%s185 + $0x18] sm:$0xff] %v264
        %s270 = sand.u32 %s109, 1
        %s271 = scalar_lea.sflag [#allocation3], %s270
        %s272 = sand.u32 %s109, 1
        %s273 = smul.addr %s272, 32
        %s274 = scalar_lea.vmem [#allocation2], %s273
        // Predicated region
        $region33: #{tpu_custom_call.1} parent=31 // pred_check
          %p275 = pneg %p119
        $region34: #{tpu_custom_call.1} parent=31 // pred_check_branch
          %277 = sbr.rel (%p275) target = $region36
        $region35: #{tpu_custom_call.1} parent=31 // pred_region
          %279 = vsyncadd %s271, 0
          %s280 = smul.addr %s21, 4
          %s281 = sadd.s32 %s22, %s280
          %s282 = smul.addr %s281, 8
          %s283 = scalar_lea.hbm %s3, %s282
          %s284 = sshll.u32 %s274, 4
          %s285 = int_to_ptr.vmem [resolvable:$true] %s284
          %s286 = sshll.u32 %s283, 4
          %s287 = int_to_ptr.hbm [resolvable:$true] %s286
          %292 = dma.vmem_to_hbm [thread:$0]  %s285, 512, %s287, %s271, 128, 128, 8
        $region36: #{tpu_custom_call.1} parent=31 // pred_fallthru
          _
      $region32: #{tpu_custom_call.1} parent=5 // pred_fallthru
        _
      %p293 = scmp.le.s32.totalorder 2, %s12
      // Predicated region
      $region37: #{tpu_custom_call.1} parent=5 // pred_check
        %p294 = pneg %p293
      $region38: #{tpu_custom_call.1} parent=5 // pred_check_branch
        %296 = sbr.rel (%p294) target = $region40
      $region39: #{tpu_custom_call.1} parent=5 // pred_region
        %s297 = ssub.s32 %s12, 2
        // Predicated region
        $region41: #{tpu_custom_call.1} parent=39 // pred_check
          %p298 = pneg %p125
        $region42: #{tpu_custom_call.1} parent=39 // pred_check_branch
          %300 = sbr.rel (%p298) target = $region44
        $region43: #{tpu_custom_call.1} parent=39 // pred_region
          %s301 = sand.u32 %s110, 1
          %s302 = scalar_lea.sflag [#allocation3], %s301
          %s303 = sand.u32 %s110, 1
          %s304 = smul.addr %s303, 32
          %s305 = scalar_lea.vmem [#allocation2], %s304
          %307 = dma.done %s302, 512
        $region44: #{tpu_custom_call.1} parent=39 // pred_fallthru
          _
      $region40: #{tpu_custom_call.1} parent=5 // pred_fallthru
        _
    $region6: #{tpu_custom_call.1} parent=1 // loop_footer
      %s16 = sadd.s32 1, %s12
    $region7: #{tpu_custom_call.1} parent=1 // loop_footer_branch
      %11 = sbr.rel target = $region3
    $region8: #{tpu_custom_call.1} parent=1 // loop_exit
      _
    %308 = vsyncpa [#allocation3], 1
    %s309 = scalar_lea.sflag [#allocation3], 1
    %310 = vsyncpa %s309, 1

</llo_original>
